<compile_context>
chip_gen: v5e
topology: v5e:2x2
jax: 0.10.0
libtpu: 0.0.40
codegen_flags: <defaults>
</compile_context>

<pallas_src>
import jax
import jax.numpy as jnp
from jax import lax
from jax.experimental import pallas as pl
from jax.experimental.pallas import tpu as pltpu


def _round_up(x, m):
    return ((x + m - 1) // m) * m


def _vmem_plan():
    """Generation-aware VMEM sizing -> (tile budget bytes, vmem_limit_bytes)."""
    try:
        cap = int(pltpu.get_tpu_info().vmem_capacity_bytes)   # 128 MiB v5e/v6e, 64 MiB v7x
    except Exception:
        cap = 64 << 20                                        # conservative fallback
    budget = min(int(cap * 0.5), 64 << 20)
    limit = min(budget + (16 << 20), int(cap * 0.85))
    return budget, limit


def _pick_tiles(batch_p8, seq_len, emb_dim, hidden, budget_bytes):
    """Pick (TB, TS): TB large for per-step latency amortization but keeping >=2 grid blocks
    along the parallel batch axis when the batch allows it (v7x megacore); TS is the largest
    multiple of 8 whose double-buffered blocks fit the VMEM budget."""
    e_lanes = _round_up(emb_dim, 128)
    h_lanes = _round_up(hidden, 128)
    # Per (timestep, batch-row): double-buffered bf16 embedding block + bf16 hidden output
    # block, both lane-padded to 128.
    per_cell = 2 * 2 * e_lanes + 2 * 2 * h_lanes

    if batch_p8 >= 256:
        tb = 128
    elif batch_p8 >= 128:
        tb = 64          # keep >= 2 parallel batch blocks so both v7x TensorCores get work
    else:
        tb = batch_p8    # single sublane-aligned block for small batches

    ts = max(8, (budget_bytes // (per_cell * tb)) // 8 * 8)
    ts = min(ts, 256, _round_up(seq_len, 8))
    return tb, ts


def _rnn_kernel(emb_ref, wih_ref, whh_ref, bias_ref, out_ref, h_scr):
    # emb_ref : (TS, TB, E)  bf16   time-major embedding chunk for this batch tile
    # wih_ref : (E, H)       bf16   W_ih^T (resident)
    # whh_ref : (H, H)       bf16   W_hh^T (resident)
    # bias_ref: (1, H)       f32    b_ih + b_hh (resident)
    # out_ref : (TS, TB, H)  bf16   hidden states for this chunk
    # h_scr   : (TB, H)      bf16   hidden-state carry across sequence chunks
    ts, tb, _ = emb_ref.shape
    hid = whh_ref.shape[0]

    @pl.when(pl.program_id(1) == 0)
    def _init():                                   # new batch tile -> reset the carry
        h_scr[...] = jnp.zeros_like(h_scr)

    wih = wih_ref[...]                             # loop-invariant weights, hoisted
    whh = whh_ref[...]
    bias = jnp.broadcast_to(bias_ref[...], (tb, hid))   # broadcast once, not per step

    def input_proj(t):
        # x_t @ W_ih^T + bias.  No dependence on h -> sits OFF the serial chain.
        xp = jnp.dot(emb_ref[t], wih, preferred_element_type=jnp.float32)   # (TB, H) f32
        return xp + bias

    def step(t, carry):
        h_prev, xp_t = carry
        # Prefetch the NEXT step's input projection; its MXU work overlaps this step's
        # latency-bound hp -> add -> tanh chain.
        xp_next = input_proj(jnp.minimum(t + 1, ts - 1))
        hp = jnp.dot(h_prev, whh, preferred_element_type=jnp.float32)       # (TB, H) f32
        h_new = jnp.tanh(xp_t + hp).astype(out_ref.dtype)                   # bf16
        out_ref[t] = h_new                                                   # dense (TB, H) store
        return h_new, xp_next

    h_last, _ = lax.fori_loop(0, ts, step, (h_scr[...], input_proj(0)))
    h_scr[...] = h_last                            # carry into the next sequence chunk


def init_params(key, vocab_size, embedding_dim=300, hidden_dim=32):
    ks = jax.random.split(key, 7)
    f32 = jnp.float32
    return {
        "embedding": jax.random.normal(ks[0], (vocab_size, embedding_dim), f32),
        "w_ih": jax.random.normal(ks[1], (hidden_dim, embedding_dim), f32) * 0.05,
        "w_hh": jax.random.normal(ks[2], (hidden_dim, hidden_dim), f32) * 0.05,
        "b_ih": jax.random.normal(ks[3], (hidden_dim,), f32) * 0.05,
        "b_hh": jax.random.normal(ks[4], (hidden_dim,), f32) * 0.05,
        "fc_w": jax.random.normal(ks[5], (1, hidden_dim), f32) * 0.1,
        "fc_b": jax.random.normal(ks[6], (1,), f32) * 0.1,
    }


@jax.jit
def rnn_sentiment_forward(tokens, params):
    B, S = tokens.shape
    E = params["embedding"].shape[1]
    H = params["w_hh"].shape[0]

    budget, vmem_limit = _vmem_plan()
    TB, TS = _pick_tiles(_round_up(B, 8), S, E, H, budget)
    B_p = _round_up(B, TB)
    S_p = _round_up(S, TS)

    # Pad batch (sublane alignment / even tiling) and sequence (tail chunk).  Padding uses
    # token id 0; the recurrence is causal and row-independent, so real outputs are unaffected
    # and the padded rows/steps are sliced away below.
    tokens_p = jnp.pad(tokens.astype(jnp.int32), ((0, B_p - B), (0, S_p - S)))

    # Embedding gather directly in time-major order, bf16 (halves the dominant HBM stream).
    emb_tm = jnp.take(params["embedding"].astype(jnp.bfloat16), tokens_p.T, axis=0)  # (S_p, B_p, E)

    wih = params["w_ih"].T.astype(jnp.bfloat16)                    # (E, H)
    whh = params["w_hh"].T.astype(jnp.bfloat16)                    # (H, H)
    bias = (params["b_ih"] + params["b_hh"]).reshape(1, H).astype(jnp.float32)

    grid = (B_p // TB, S_p // TS)

    hs_tm = pl.pallas_call(
        _rnn_kernel,
        out_shape=jax.ShapeDtypeStruct((S_p, B_p, H), jnp.bfloat16),
        grid=grid,
        in_specs=[
            pl.BlockSpec((TS, TB, E), lambda i, j: (j, i, 0)),     # embedding chunk
            pl.BlockSpec((E, H), lambda i, j: (0, 0)),             # W_ih^T (resident)
            pl.BlockSpec((H, H), lambda i, j: (0, 0)),             # W_hh^T (resident)
            pl.BlockSpec((1, H), lambda i, j: (0, 0)),             # combined bias (resident)
        ],
        out_specs=pl.BlockSpec((TS, TB, H), lambda i, j: (j, i, 0)),
        scratch_shapes=[pltpu.VMEM((TB, H), jnp.bfloat16)],        # h carry across seq chunks
        compiler_params=pltpu.CompilerParams(
            dimension_semantics=("parallel", "arbitrary"),
            vmem_limit_bytes=vmem_limit),
    )(emb_tm, wih, whh, bias)

    # FC head (H -> 1) + relu + sigmoid in XLA on the (much smaller) hidden stream.
    hs = hs_tm[:S, :B].astype(jnp.float32)                         # (S, B, H)
    logits = jnp.einsum("sbh,oh->sbo", hs, params["fc_w"]) + params["fc_b"]
    y = jax.nn.sigmoid(jax.nn.relu(logits))                        # (S, B, 1)
    return jnp.transpose(y, (1, 0, 2)).reshape(B * S, 1)


def reference_forward(tokens, params):
    """Pure-JAX f32 mirror of RNNSentiment.forward (vanilla RNN, 1 layer, unidirectional)."""
    B, S = tokens.shape
    H = params["w_hh"].shape[0]
    emb = jnp.take(params["embedding"], tokens, axis=0)            # (B, S, E)

    def step(h, x_t):
        h = jnp.tanh(x_t @ params["w_ih"].T + params["b_ih"]
                     + h @ params["w_hh"].T + params["b_hh"])
        return h, h

    _, hs = jax.lax.scan(step, jnp.zeros((B, H), jnp.float32),
                         jnp.transpose(emb, (1, 0, 2)))            # (S, B, H)
    hs = jnp.transpose(hs, (1, 0, 2)).reshape(B * S, H)
    logits = hs @ params["fc_w"].T + params["fc_b"]
    return jax.nn.sigmoid(jax.nn.relu(logits))


if __name__ == "__main__":
    VOCAB, EMB_DIM, HIDDEN, B, S = 1000, 300, 32, 2, 8
    key = jax.random.PRNGKey(0)
    pkey, tkey = jax.random.split(key)
    params = init_params(pkey, VOCAB, EMB_DIM, HIDDEN)
    tokens = jax.random.randint(tkey, (B, S), 0, VOCAB, dtype=jnp.int32)

    y = rnn_sentiment_forward(tokens, params)
    y = jax.block_until_ready(y)
    y_ref = reference_forward(tokens, params)

    assert y.shape == (B * S, 1), y.shape
    # bf16 embeddings / W_ih / W_hh / h-carry in the kernel vs an f32 reference -> small,
    # bounded mismatch (outputs live in [0.5, ~0.9) after relu+sigmoid).
    assert jnp.allclose(y, y_ref, atol=1e-2, rtol=1e-2), (y, y_ref)
    print("KERNEL_OK")
</pallas_src>

<mosaic_0001>
module attributes {stable_mosaic.version = 11 : i64} {
  func.func @_rnn_kernel(%arg0: i32, %arg1: i32, %arg2: memref<8x8x300xbf16, #tpu.memory_space<vmem>>, %arg3: memref<300x32xbf16, #tpu.memory_space<vmem>>, %arg4: memref<32x32xbf16, #tpu.memory_space<vmem>>, %arg5: memref<1x32xf32, #tpu.memory_space<vmem>>, %arg6: memref<8x8x32xbf16, #tpu.memory_space<vmem>>, %arg7: memref<8x32xbf16, #tpu.memory_space<vmem>>) attributes {dimension_semantics = [#tpu.dimension_semantics<parallel>, #tpu.dimension_semantics<arbitrary>], iteration_bounds = array<i64: 1, 1>, scalar_prefetch = 0 : i64, scratch_operands = 1 : i64, tpu.core_type = #tpu.core_type<tc>, window_params = [{transform_indices = @transform_0, window_bounds = array<i64: 8, 8, 300>}, {pipeline_mode = #tpu.pipeline_mode<synchronous>, transform_indices = @transform_1, window_bounds = array<i64: 300, 32>}, {pipeline_mode = #tpu.pipeline_mode<synchronous>, transform_indices = @transform_2, window_bounds = array<i64: 32, 32>}, {pipeline_mode = #tpu.pipeline_mode<synchronous>, transform_indices = @transform_3, window_bounds = array<i64: 1, 32>}, {transform_indices = @transform_4, window_bounds = array<i64: 8, 8, 32>}]} {
    %c0_i32 = arith.constant 0 : i32
    %0 = arith.cmpi eq, %arg1, %c0_i32 : i32
    %1 = arith.extui %0 : i1 to i32
    %c0_i32_0 = arith.constant 0 : i32
    %2 = arith.cmpi ne, %1, %c0_i32_0 : i32
    scf.if %2 {
      %cst_15 = arith.constant 0.000000e+00 : bf16
      %16 = vector.broadcast %cst_15 : bf16 to vector<8x32xbf16>
      %c0_16 = arith.constant 0 : index
      %c0_17 = arith.constant 0 : index
      %17 = vector.load %arg7[%c0_16, %c0_17] : memref<8x32xbf16, #tpu.memory_space<vmem>>, vector<8x32xbf16>
      tpu.vector_store %arg7[%c0_16, %c0_17], %16 {strides = array<i32>} : memref<8x32xbf16, #tpu.memory_space<vmem>>, vector<8x32xbf16>,
    } else {
    }
    %c0 = arith.constant 0 : index
    %c0_1 = arith.constant 0 : index
    %3 = vector.load %arg3[%c0, %c0_1] : memref<300x32xbf16, #tpu.memory_space<vmem>>, vector<300x32xbf16>
    %c0_2 = arith.constant 0 : index
    %c0_3 = arith.constant 0 : index
    %4 = vector.load %arg4[%c0_2, %c0_3] : memref<32x32xbf16, #tpu.memory_space<vmem>>, vector<32x32xbf16>
    %c0_4 = arith.constant 0 : index
    %c0_5 = arith.constant 0 : index
    %5 = vector.load %arg5[%c0_4, %c0_5] : memref<1x32xf32, #tpu.memory_space<vmem>>, vector<1x32xf32>
    %6 = vector.shape_cast %5 : vector<1x32xf32> to vector<1x32xf32>
    %7 = vector.broadcast %6 : vector<1x32xf32> to vector<8x32xf32>
    %c0_6 = arith.constant 0 : index
    %c0_7 = arith.constant 0 : index
    %8 = vector.load %arg7[%c0_6, %c0_7] : memref<8x32xbf16, #tpu.memory_space<vmem>>, vector<8x32xbf16>
    %c0_8 = arith.constant 0 : index
    %c0_9 = arith.constant 0 : index
    %c0_10 = arith.constant 0 : index
    %9 = vector.load %arg2[%c0_8, %c0_9, %c0_10] : memref<8x8x300xbf16, #tpu.memory_space<vmem>>, vector<1x8x300xbf16>
    %10 = vector.shape_cast %9 : vector<1x8x300xbf16> to vector<8x300xbf16>
    %cst = arith.constant dense<0.000000e+00> : vector<8x32xf32>
    %11 = tpu.matmul %10, %3, %cst {dimension_numbers = #tpu.dot_dimension_numbers<[1], [0], [0], [1], [0, 0, 1, 1], [], []>} : vector<8x300xbf16>, vector<300x32xbf16>, vector<8x32xf32> -> vector<8x32xf32>
    %12 = arith.addf %11, %7 : vector<8x32xf32>
    %c0_i32_11 = arith.constant 0 : i32
    %c8_i32 = arith.constant 8 : i32
    %13 = arith.addi %c0_i32_11, %c8_i32 : i32
    %c1_i32 = arith.constant 1 : i32
    %14:2 = scf.for %arg8 = %c0_i32_11 to %13 step %c1_i32 iter_args(%arg9 = %8, %arg10 = %12) -> (vector<8x32xbf16>, vector<8x32xf32>)  : i32 {
      %c1_i32_15 = arith.constant 1 : i32
      %16 = arith.addi %arg8, %c1_i32_15 : i32
      %c7_i32 = arith.constant 7 : i32
      %17 = arith.minsi %16, %c7_i32 : i32
      %18 = arith.index_cast %17 : i32 to index
      %c0_16 = arith.constant 0 : index
      %c0_17 = arith.constant 0 : index
      %19 = vector.load %arg2[%18, %c0_16, %c0_17] : memref<8x8x300xbf16, #tpu.memory_space<vmem>>, vector<1x8x300xbf16>
      %20 = vector.shape_cast %19 : vector<1x8x300xbf16> to vector<8x300xbf16>
      %cst_18 = arith.constant dense<0.000000e+00> : vector<8x32xf32>
      %21 = tpu.matmul %20, %3, %cst_18 {dimension_numbers = #tpu.dot_dimension_numbers<[1], [0], [0], [1], [0, 0, 1, 1], [], []>} : vector<8x300xbf16>, vector<300x32xbf16>, vector<8x32xf32> -> vector<8x32xf32>
      %22 = arith.addf %21, %7 : vector<8x32xf32>
      %cst_19 = arith.constant dense<0.000000e+00> : vector<8x32xf32>
      %23 = tpu.matmul %arg9, %4, %cst_19 {dimension_numbers = #tpu.dot_dimension_numbers<[1], [0], [0], [1], [0, 0, 1, 1], [], []>} : vector<8x32xbf16>, vector<32x32xbf16>, vector<8x32xf32> -> vector<8x32xf32>
      %24 = arith.addf %arg10, %23 : vector<8x32xf32>
      %25 = math.tanh %24 : vector<8x32xf32>
      %26 = arith.truncf %25 : vector<8x32xf32> to vector<8x32xbf16>
      %27 = arith.index_cast %arg8 : i32 to index
      %c0_20 = arith.constant 0 : index
      %c0_21 = arith.constant 0 : index
      %28 = vector.load %arg6[%27, %c0_20, %c0_21] : memref<8x8x32xbf16, #tpu.memory_space<vmem>>, vector<1x8x32xbf16>
      %29 = vector.shape_cast %28 : vector<1x8x32xbf16> to vector<8x32xbf16>
      %30 = vector.shape_cast %26 : vector<8x32xbf16> to vector<1x8x32xbf16>
      tpu.vector_store %arg6[%27, %c0_20, %c0_21], %30 {strides = array<i32>} : memref<8x8x32xbf16, #tpu.memory_space<vmem>>, vector<1x8x32xbf16>,
      scf.yield %26, %22 : vector<8x32xbf16>, vector<8x32xf32>
    }
    %c8_i32_12 = arith.constant 8 : i32
    %c0_13 = arith.constant 0 : index
    %c0_14 = arith.constant 0 : index
    %15 = vector.load %arg7[%c0_13, %c0_14] : memref<8x32xbf16, #tpu.memory_space<vmem>>, vector<8x32xbf16>
    tpu.vector_store %arg7[%c0_13, %c0_14], %14#0 {strides = array<i32>} : memref<8x32xbf16, #tpu.memory_space<vmem>>, vector<8x32xbf16>,
    return
  }
  func.func @transform_0(%arg0: i32, %arg1: i32) -> (i32, i32, i32) {
    %c0_i32 = arith.constant 0 : i32
    %c0_i32_0 = arith.constant 0 : i32
    return %arg1, %arg0, %c0_i32 : i32, i32, i32
  }
  func.func @transform_1(%arg0: i32, %arg1: i32) -> (i32, i32) {
    %c0_i32 = arith.constant 0 : i32
    %c0_i32_0 = arith.constant 0 : i32
    %c0_i32_1 = arith.constant 0 : i32
    return %c0_i32, %c0_i32_0 : i32, i32
  }
  func.func @transform_2(%arg0: i32, %arg1: i32) -> (i32, i32) {
    %c0_i32 = arith.constant 0 : i32
    %c0_i32_0 = arith.constant 0 : i32
    %c0_i32_1 = arith.constant 0 : i32
    return %c0_i32, %c0_i32_0 : i32, i32
  }
  func.func @transform_3(%arg0: i32, %arg1: i32) -> (i32, i32) {
    %c0_i32 = arith.constant 0 : i32
    %c0_i32_0 = arith.constant 0 : i32
    %c0_i32_1 = arith.constant 0 : i32
    return %c0_i32, %c0_i32_0 : i32, i32
  }
  func.func @transform_4(%arg0: i32, %arg1: i32) -> (i32, i32, i32) {
    %c0_i32 = arith.constant 0 : i32
    %c0_i32_0 = arith.constant 0 : i32
    return %arg1, %arg0, %c0_i32 : i32, i32, i32
  }
}

</mosaic_0001>

<llo_original>
// kernel: rnn_sentiment_forward.1
$region0: #{rnn_sentiment_forward.1}
  #allocation0 [shape = 'u32[]', space=smem, size = 0x4, offset = 0x4, fixed_abs, tag = 'smem constant byte address 0x4 - core index']
  #allocation1 [shape = 'u32[72,128]{1,0:T(1,128)}', space=vmem, size = 0x9000, scoped, tag = 'internal scratch']
  #allocation2 [shape = 'bf16[8,32]{1,0:T(8,128)(2,1)}', space=vmem, size = 0x800, scoped, tag = 'scratch operand']
  %s0 = inlined_call_operand.vmem [shape: bf16[8,8,300], index: 0, kind: input, shape index: {}]
  %s1 = inlined_call_operand.vmem [shape: bf16[300,32], index: 1, kind: input, shape index: {}]
  %s2 = inlined_call_operand.vmem [shape: bf16[32,32], index: 2, kind: input, shape index: {}]
  %s3 = inlined_call_operand.vmem [shape: f32[1,32], index: 3, kind: input, shape index: {}]
  %s4 = inlined_call_operand.vmem [shape: bf16[8,8,32], index: 4, kind: output, shape index: {}]
  %s5 = sld [smem:[#allocation0]]
  $region37: #{rnn_sentiment_forward.1} parent=0
    _
  %s7 = ssub.s32 1, %s5
  %s8 = scalar_select 0, %s7, %s5
  // Predicated region
  $region2: #{rnn_sentiment_forward.1} parent=0 // pred_check
    _
  $region3: #{rnn_sentiment_forward.1} parent=0 // pred_check_branch
    %10 = sbr.rel (0) target = $region5
  $region4: #{rnn_sentiment_forward.1} parent=0 // pred_region
    _
  $region5: #{rnn_sentiment_forward.1} parent=0 // pred_fallthru
    _
  // Predicated region
  $region6: #{rnn_sentiment_forward.1} parent=0 // pred_check
    _
  $region7: #{rnn_sentiment_forward.1} parent=0 // pred_check_branch
    %12 = sbr.rel (0) target = $region9
  $region8: #{rnn_sentiment_forward.1} parent=0 // pred_region
    _
  $region9: #{rnn_sentiment_forward.1} parent=0 // pred_fallthru
    _
  // Predicated region
  $region10: #{rnn_sentiment_forward.1} parent=0 // pred_check
    _
  $region11: #{rnn_sentiment_forward.1} parent=0 // pred_check_branch
    %14 = sbr.rel (0) target = $region13
  $region12: #{rnn_sentiment_forward.1} parent=0 // pred_region
    _
  $region13: #{rnn_sentiment_forward.1} parent=0 // pred_fallthru
    _
  // Predicated region
  $region14: #{rnn_sentiment_forward.1} parent=0 // pred_check
    _
  $region15: #{rnn_sentiment_forward.1} parent=0 // pred_check_branch
    %16 = sbr.rel (0) target = $region17
  $region16: #{rnn_sentiment_forward.1} parent=0 // pred_region
    _
  $region17: #{rnn_sentiment_forward.1} parent=0 // pred_fallthru
    _
  %p18 = scmp.eq.s32.totalorder 0, 0
  // Predicated region
  $region18: #{rnn_sentiment_forward.1} parent=0 // pred_check
    %p19 = pneg %p18
  $region19: #{rnn_sentiment_forward.1} parent=0 // pred_check_branch
    %21 = sbr.rel (%p19) target = $region21
  $region20: #{rnn_sentiment_forward.1} parent=0 // pred_region
    %vm22 = vcmask 257024
    %23 = vst.msk [vmem:[#allocation2] sm:$0xf] %vm22, 0
  $region21: #{rnn_sentiment_forward.1} parent=0 // pred_fallthru
    _
  %v24 = vld [vmem:[%s1] sm:$0xf]
  %v25 = vld [vmem:[%s1 + $0x4] sm:$0xf]
  %v26 = vld [vmem:[%s1 + $0x8] sm:$0xf]
  %v27 = vld [vmem:[%s1 + $0xc] sm:$0xf]
  %v28 = vld [vmem:[%s1 + $0x10] sm:$0xf]
  %v29 = vld [vmem:[%s1 + $0x14] sm:$0xf]
  %v30 = vld [vmem:[%s1 + $0x18] sm:$0xf]
  %v31 = vld [vmem:[%s1 + $0x1c] sm:$0xf]
  %v32 = vld [vmem:[%s1 + $0x20] sm:$0xf]
  %v33 = vld [vmem:[%s1 + $0x24] sm:$0xf]
  %v34 = vld [vmem:[%s1 + $0x28] sm:$0xf]
  %v35 = vld [vmem:[%s1 + $0x2c] sm:$0xf]
  %v36 = vld [vmem:[%s1 + $0x30] sm:$0xf]
  %v37 = vld [vmem:[%s1 + $0x34] sm:$0xf]
  %v38 = vld [vmem:[%s1 + $0x38] sm:$0xf]
  %v39 = vld [vmem:[%s1 + $0x3c] sm:$0xf]
  %v40 = vld [vmem:[%s1 + $0x40] sm:$0xf]
  %v41 = vld [vmem:[%s1 + $0x44] sm:$0xf]
  %v42 = vld [vmem:[%s1 + $0x48] sm:$0xf]
  %v43 = vld [vmem:[%s1 + $0x4c] sm:$0xf]
  %v44 = vld [vmem:[%s1 + $0x50] sm:$0xf]
  %v45 = vld [vmem:[%s1 + $0x54] sm:$0xf]
  %v46 = vld [vmem:[%s1 + $0x58] sm:$0xf]
  %v47 = vld [vmem:[%s1 + $0x5c] sm:$0xf]
  %v48 = vld [vmem:[%s1 + $0x60] sm:$0xf]
  %v49 = vld [vmem:[%s1 + $0x64] sm:$0xf]
  %v50 = vld [vmem:[%s1 + $0x68] sm:$0xf]
  %v51 = vld [vmem:[%s1 + $0x6c] sm:$0xf]
  %v52 = vld [vmem:[%s1 + $0x70] sm:$0xf]
  %v53 = vld [vmem:[%s1 + $0x74] sm:$0xf]
  %v54 = vld [vmem:[%s1 + $0x78] sm:$0xf]
  %v55 = vld [vmem:[%s1 + $0x7c] sm:$0xf]
  %v56 = vld [vmem:[%s1 + $0x80] sm:$0xf]
  %v57 = vld [vmem:[%s1 + $0x84] sm:$0xf]
  %v58 = vld [vmem:[%s1 + $0x88] sm:$0xf]
  %v59 = vld [vmem:[%s1 + $0x8c] sm:$0xf]
  %v60 = vld [vmem:[%s1 + $0x90] sm:$0xf]
  %v61 = vld [vmem:[%s1 + $0x94] sm:$0x3]
  %v62 = vld [vmem:[%s2] sm:$0xf]
  %v63 = vld [vmem:[%s2 + $0x4] sm:$0xf]
  %v64 = vld [vmem:[%s2 + $0x8] sm:$0xf]
  %v65 = vld [vmem:[%s2 + $0xc] sm:$0xf]
  %v66 = vld [vmem:[%s3] sm:$0x1]
  %v68 = vperm.slane %v66, 0
  %v70 = vld [vmem:[#allocation2] sm:$0xf]
  %v71 = vld [vmem:[%s0] sm:$0xff]
  %v72 = vld [vmem:[%s0 + $0x8] sm:$0xf]
  %v75 = vunpack.c.l.b16 %v71
  %v76 = vunpack.c.h.b16 %v71
  %v77 = vunpack.c.l.b16 %v72
  %v78 = vpack.c.b16 %v75, %v75
  %v79 = vpack.c.b16 %v76, %v76
  %v80 = vpack.c.b16 %v77, %v77
  %v121 = vunpack.c.l.b16 %v24
  %v122 = vunpack.c.l.b16 %v25
  %v123 = vunpack.c.l.b16 %v26
  %v124 = vunpack.c.l.b16 %v27
  %v125 = vunpack.c.l.b16 %v28
  %v126 = vunpack.c.l.b16 %v29
  %v127 = vunpack.c.l.b16 %v30
  %v128 = vunpack.c.l.b16 %v31
  %v129 = vunpack.c.l.b16 %v32
  %v130 = vunpack.c.l.b16 %v33
  %v131 = vunpack.c.l.b16 %v34
  %v132 = vunpack.c.l.b16 %v35
  %v133 = vunpack.c.l.b16 %v36
  %v134 = vunpack.c.l.b16 %v37
  %v135 = vunpack.c.l.b16 %v38
  %v136 = vunpack.c.l.b16 %v39
  %v137 = vunpack.c.l.b16 %v40
  %v138 = vunpack.c.l.b16 %v41
  %v139 = vunpack.c.l.b16 %v42
  %v140 = vunpack.c.l.b16 %v43
  %v141 = vunpack.c.l.b16 %v44
  %v142 = vunpack.c.l.b16 %v45
  %v143 = vunpack.c.l.b16 %v46
  %v144 = vunpack.c.l.b16 %v47
  %v145 = vunpack.c.l.b16 %v48
  %v146 = vunpack.c.l.b16 %v49
  %v147 = vunpack.c.l.b16 %v50
  %v148 = vunpack.c.l.b16 %v51
  %v149 = vunpack.c.l.b16 %v52
  %v150 = vunpack.c.l.b16 %v53
  %v151 = vunpack.c.l.b16 %v54
  %v152 = vunpack.c.l.b16 %v55
  %v153 = vunpack.c.l.b16 %v56
  %v154 = vunpack.c.l.b16 %v57
  %v155 = vunpack.c.l.b16 %v58
  %v156 = vunpack.c.l.b16 %v59
  %v157 = vunpack.c.l.b16 %v60
  %v158 = vunpack.c.l.b16 %v61
  %v159 = vpack.c.b16 %v122, %v121
  %v160 = vpack.c.b16 %v124, %v123
  %v161 = vpack.c.b16 %v126, %v125
  %v162 = vpack.c.b16 %v128, %v127
  %v163 = vpack.c.b16 %v130, %v129
  %v164 = vpack.c.b16 %v132, %v131
  %v165 = vpack.c.b16 %v134, %v133
  %v166 = vpack.c.b16 %v136, %v135
  %v167 = vpack.c.b16 %v138, %v137
  %v168 = vpack.c.b16 %v140, %v139
  %v169 = vpack.c.b16 %v142, %v141
  %v170 = vpack.c.b16 %v144, %v143
  %v171 = vpack.c.b16 %v146, %v145
  %v172 = vpack.c.b16 %v148, %v147
  %v173 = vpack.c.b16 %v150, %v149
  %v174 = vpack.c.b16 %v152, %v151
  %v175 = vpack.c.b16 %v154, %v153
  %v176 = vpack.c.b16 %v156, %v155
  %v177 = vpack.c.b16 %v158, %v157
  %vm196 = vcmask 359424
  %v198 = vsel %vm196, %v80, 0
  %vm200 = vcmask 1045504
  %v202 = vsel %vm200, %v177, 0
  %204 = vmatpush.bf16.msra.mxu0 %v166
  %205 = vmatpush.bf16.msra.mxu0 %v165
  %206 = vmatpush.bf16.msra.mxu0 %v164
  %207 = vmatpush.bf16.msra.mxu0 %v163
  %208 = vmatpush.bf16.msra.mxu0 %v162
  %209 = vmatpush.bf16.msra.mxu0 %v161
  %210 = vmatpush.bf16.msra.mxu0 %v160
  %211 = vmatpush.bf16.msra.mxu0 %v159
  %212 = vmatmul.bf16.gmra.mxu0 %v78
  %v213 = vpop.f32.mrf.mxu0
  %v214 = vadd.f32 %v68, %v213
  %v215 = vpop.f32.mrf.mxu0
  %216 = vdwg.mxu0
  %217 = vmatpush.bf16.msra.mxu0 %v174
  %218 = vmatpush.bf16.msra.mxu0 %v173
  %219 = vmatpush.bf16.msra.mxu0 %v172
  %220 = vmatpush.bf16.msra.mxu0 %v171
  %221 = vmatpush.bf16.msra.mxu0 %v170
  %222 = vmatpush.bf16.msra.mxu0 %v169
  %223 = vmatpush.bf16.msra.mxu0 %v168
  %224 = vmatpush.bf16.msra.mxu0 %v167
  %225 = vmatmul.bf16.gmra.mxu0 %v79
  %v226 = vpop.f32.mrf.mxu0
  %v227 = vadd.f32 %v214, %v226
  %v228 = vpop.f32.mrf.mxu0
  %229 = vdwg.mxu0
  %230 = vmatpush.bf16.msra.mxu0 0
  %231 = vmatpush.bf16.msra.mxu0 0
  %232 = vmatpush.bf16.msra.mxu0 0
  %233 = vmatpush.bf16.msra.mxu0 0
  %234 = vmatpush.bf16.msra.mxu0 0
  %235 = vmatpush.bf16.msra.mxu0 %v202
  %236 = vmatpush.bf16.msra.mxu0 %v176
  %237 = vmatpush.bf16.msra.mxu0 %v175
  %238 = vmatmul.bf16.gmra.mxu0 %v198
  %v239 = vpop.f32.mrf.mxu0
  %v240 = vadd.f32 %v227, %v239
  %v241 = vpop.f32.mrf.mxu0
  %242 = vdwg.mxu0
  loop: start=0, step=1, limit=8
  $region22: #{rnn_sentiment_forward.1} parent=0 // loop_pre_header
    _
  $region23: #{rnn_sentiment_forward.1} parent=0 // loop_header
    %s244 = sphi 0, %s248
    %p245 = scmp.ge.s32.totalorder %s244, 8
    %v249 = vphi %v70, %v342
    %v250 = vphi %v240, %v308
  $region24: #{rnn_sentiment_forward.1} parent=0 // loop_header_branch
    %247 = sbr.rel (%p245) target = $region28
  $region25: #{rnn_sentiment_forward.1} parent=0 // loop_body
    %s251 = sadd.s32 %s244, 1
    %p252 = scmp.lt.s32.totalorder %s251, 7
    %s253 = scalar_select %p252, %s251, 7
    %s254 = smul.u32 %s253, 3
    %s255 = smul.addr %s254, 4
    %s256 = scalar_lea.vmem %s0, %s255
    %v257 = vld [vmem:[%s256] sm:$0xff]
    %v258 = vld [vmem:[%s256 + $0x8] sm:$0xf]
    %v261 = vunpack.c.l.b16 %v257
    %v262 = vunpack.c.h.b16 %v257
    %v263 = vunpack.c.l.b16 %v258
    %v264 = vpack.c.b16 %v261, %v261
    %v265 = vpack.c.b16 %v262, %v262
    %v266 = vpack.c.b16 %v263, %v263
    %v270 = vsel %vm196, %v266, 0
    %272 = vmatpush.bf16.msra.mxu0 %v166
    %273 = vmatpush.bf16.msra.mxu0 %v165
    %274 = vmatpush.bf16.msra.mxu0 %v164
    %275 = vmatpush.bf16.msra.mxu0 %v163
    %276 = vmatpush.bf16.msra.mxu0 %v162
    %277 = vmatpush.bf16.msra.mxu0 %v161
    %278 = vmatpush.bf16.msra.mxu0 %v160
    %279 = vmatpush.bf16.msra.mxu0 %v159
    %280 = vmatmul.bf16.gmra.mxu0 %v264
    %v281 = vpop.f32.mrf.mxu0
    %v282 = vadd.f32 %v68, %v281
    %v283 = vpop.f32.mrf.mxu0
    %284 = vdwg.mxu0
    %285 = vmatpush.bf16.msra.mxu0 %v174
    %286 = vmatpush.bf16.msra.mxu0 %v173
    %287 = vmatpush.bf16.msra.mxu0 %v172
    %288 = vmatpush.bf16.msra.mxu0 %v171
    %289 = vmatpush.bf16.msra.mxu0 %v170
    %290 = vmatpush.bf16.msra.mxu0 %v169
    %291 = vmatpush.bf16.msra.mxu0 %v168
    %292 = vmatpush.bf16.msra.mxu0 %v167
    %293 = vmatmul.bf16.gmra.mxu0 %v265
    %v294 = vpop.f32.mrf.mxu0
    %v295 = vadd.f32 %v282, %v294
    %v296 = vpop.f32.mrf.mxu0
    %297 = vdwg.mxu0
    %298 = vmatpush.bf16.msra.mxu0 0
    %299 = vmatpush.bf16.msra.mxu0 0
    %300 = vmatpush.bf16.msra.mxu0 0
    %301 = vmatpush.bf16.msra.mxu0 0
    %302 = vmatpush.bf16.msra.mxu0 0
    %303 = vmatpush.bf16.msra.mxu0 %v202
    %304 = vmatpush.bf16.msra.mxu0 %v176
    %305 = vmatpush.bf16.msra.mxu0 %v175
    %306 = vmatmul.bf16.gmra.mxu0 %v270
    %v307 = vpop.f32.mrf.mxu0
    %v308 = vadd.f32 %v295, %v307
    %v309 = vpop.f32.mrf.mxu0
    %310 = vdwg.mxu0
    %v315 = vunpack.c.l.b16 %v62
    %v316 = vunpack.c.l.b16 %v63
    %v317 = vunpack.c.l.b16 %v64
    %v318 = vunpack.c.l.b16 %v65
    %v319 = vpack.c.b16 %v316, %v315
    %v320 = vpack.c.b16 %v318, %v317
    %vm323 = vcmask 261120
    %v325 = vsel %vm323, %v249, 0
    %327 = vmatpush.bf16.msra.mxu0 0
    %328 = vmatpush.bf16.msra.mxu0 0
    %329 = vmatpush.bf16.msra.mxu0 0
    %330 = vmatpush.bf16.msra.mxu0 0
    %331 = vmatpush.bf16.msra.mxu0 0
    %332 = vmatpush.bf16.msra.mxu0 0
    %333 = vmatpush.bf16.msra.mxu0 %v320
    %334 = vmatpush.bf16.msra.mxu0 %v319
    %335 = vmatmul.bf16.gmra.mxu0 %v325
    %v336 = vpop.f32.mrf.mxu0
    %v337 = vadd.f32 0.0, %v336
    %v338 = vpop.f32.mrf.mxu0
    %339 = vdwg.mxu0
    %v340 = vadd.f32 %v250, %v337
    %v341 = vtanh.pop %v340
    %v342 = vpack.c.bf16 %v341, %v341
    %s343 = smul.addr %s244, 4
    %s344 = scalar_lea.vmem %s4, %s343
    %vm345 = vcmask 257024
    %346 = vst.msk [vmem:[%s344] sm:$0xf] %vm345, %v342
  $region26: #{rnn_sentiment_forward.1} parent=0 // loop_footer
    %s248 = sadd.s32 1, %s244
  $region27: #{rnn_sentiment_forward.1} parent=0 // loop_footer_branch
    %243 = sbr.rel target = $region23
  $region28: #{rnn_sentiment_forward.1} parent=0 // loop_exit
    _
  %vm347 = vcmask 257024
  %348 = vst.msk [vmem:[#allocation2] sm:$0xf] %vm347, %v249
  // Predicated region
  $region29: #{rnn_sentiment_forward.1} parent=0 // pred_check
    _
  $region30: #{rnn_sentiment_forward.1} parent=0 // pred_check_branch
    %350 = sbr.rel (0) target = $region32
  $region31: #{rnn_sentiment_forward.1} parent=0 // pred_region
    _
  $region32: #{rnn_sentiment_forward.1} parent=0 // pred_fallthru
    _
  // Predicated region
  $region33: #{rnn_sentiment_forward.1} parent=0 // pred_check
    _
  $region34: #{rnn_sentiment_forward.1} parent=0 // pred_check_branch
    %352 = sbr.rel (0) target = $region36
  $region35: #{rnn_sentiment_forward.1} parent=0 // pred_region
    _
  $region36: #{rnn_sentiment_forward.1} parent=0 // pred_fallthru
    _

</llo_original>
